<compile_context>
chip_gen: v7x
topology: tpu7x:2x2x1
jax: 0.10.0
libtpu: 0.0.40
codegen_flags: <defaults>
</compile_context>

<pallas_src>
import math

import jax
import jax.numpy as jnp
from jax.experimental import pallas as pl
from jax.experimental.pallas import tpu as pltpu


# ----------------------------------------------------------------------------- kernel

def _make_kernel(act_dim: int, hidden2: int, tanh_dtype):
    def kernel(x_ref, a_ref, eps_ref, w1_ref, w2_ref, w3_ref, slab_ref, out_ref):
        mm_dtype = w1_ref.dtype                      # matmul input dtype (bf16 or f32)

        x = x_ref[...].astype(mm_dtype)              # cast in-kernel: no wrapper HBM pass
        slab = slab_ref[...]                         # (6, width) f32 constants slab

        b1 = slab[0:1, :hidden2]                     # (1, 2H)
        b2 = slab[1:2, :hidden2]                     # (1, 2H)
        b3 = slab[2:3, :act_dim + 1]                 # (1, act_dim+1)
        std = slab[3:4, :act_dim]                    # exp(log_std), precomputed
        inv_std = slab[4:5, :act_dim]                # exp(-log_std), precomputed
        c = slab[5:6, 0:1]                           # -sum(log_std) - act_dim*0.5*log(2*pi)

        # Fused policy+value hidden layers (block-diagonal weights keep the MLPs separate).
        # tanh runs in tanh_dtype (bf16 on the fast path) so the next matmul consumes it directly.
        h1 = jnp.tanh(
            (jnp.dot(x, w1_ref[...], preferred_element_type=jnp.float32) + b1
             ).astype(tanh_dtype))
        h2 = jnp.tanh(
            (jnp.dot(h1.astype(mm_dtype), w2_ref[...],
                     preferred_element_type=jnp.float32) + b2
             ).astype(tanh_dtype))
        h3 = jnp.dot(h2.astype(mm_dtype), w3_ref[...],
                     preferred_element_type=jnp.float32) + b3     # (TB, act_dim+1) f32

        mu = h3[:, :act_dim]                         # policy mean
        v = h3[:, act_dim:act_dim + 1]               # value head

        a = a_ref[...]                               # (TB, act_dim) f32
        eps = eps_ref[...]                           # (TB, act_dim) f32

        # Normal(mu, std).sample() == mu + std * eps
        pi = mu + std * eps

        z = (a - mu) * inv_std
        logp = -0.5 * jnp.sum(z * z, axis=1, keepdims=True) + c
        # For the sampled action pi, (pi - mu)/std == eps exactly.
        logp_pi = -0.5 * jnp.sum(eps * eps, axis=1, keepdims=True) + c

        # Direct slice stores (no in-kernel concatenate temporary).
        out_ref[:, :act_dim] = pi
        out_ref[:, act_dim:act_dim + 1] = logp
        out_ref[:, act_dim + 1:act_dim + 2] = logp_pi
        out_ref[:, act_dim + 2:act_dim + 3] = v

    return kernel


# ----------------------------------------------------------------------------- param fusion (once)

def _pad_row(v, width):
    v = jnp.reshape(v, (-1,))
    return jnp.pad(v, (0, width - v.shape[0]))


def fuse_actor_critic_params(log_std, mu_params, v_params, *, matmul_dtype=jnp.bfloat16):
    """Build the fused weight slabs + constants slab ONCE per parameter update."""
    (mw1, mb1), (mw2, mb2), (mw3, mb3) = mu_params
    (vw1, vb1), (vw2, vb2), (vw3, vb3) = v_params
    hidden = mw1.shape[1]
    act_dim = mw3.shape[1]
    hidden2 = 2 * hidden

    f32 = jnp.float32
    zH = jnp.zeros((hidden, hidden), f32)

    # ---- lane-fused weights (policy || value) ----
    w1 = jnp.concatenate([mw1, vw1], axis=1)                                  # (in, 2H)
    w2 = jnp.concatenate(
        [jnp.concatenate([mw2, zH], axis=1),
         jnp.concatenate([zH, vw2], axis=1)], axis=0)                         # (2H, 2H)
    w3 = jnp.concatenate(
        [jnp.concatenate([mw3, jnp.zeros((hidden, 1), f32)], axis=1),
         jnp.concatenate([jnp.zeros((hidden, act_dim), f32), vw3], axis=1)],
        axis=0)                                                               # (2H, act_dim+1)

    # ---- constants slab: [b1 | b2 | b3 | std | inv_std | c] ----
    log_std = jnp.reshape(log_std, (-1,)).astype(f32)
    std = jnp.exp(log_std)
    inv_std = jnp.exp(-log_std)
    c = -jnp.sum(log_std) - act_dim * (0.5 * math.log(2.0 * math.pi))

    width = max(hidden2, act_dim + 1)
    slab = jnp.stack([
        _pad_row(jnp.concatenate([mb1.reshape(-1), vb1.reshape(-1)]), width),
        _pad_row(jnp.concatenate([mb2.reshape(-1), vb2.reshape(-1)]), width),
        _pad_row(jnp.concatenate([mb3.reshape(-1), vb3.reshape(-1)]), width),
        _pad_row(std, width),
        _pad_row(inv_std, width),
        jnp.full((width,), c, dtype=f32),
    ], axis=0).astype(f32)                                                    # (6, width)

    return (w1.astype(matmul_dtype), w2.astype(matmul_dtype),
            w3.astype(matmul_dtype), slab)


# ----------------------------------------------------------------------------- forward

def _pick_batch_tile(B, batch_tile):
    """Big tiles for grid-step amortization; >=2 grid steps when possible (v7x megacore)."""
    if B <= 8:
        return B                                  # block == full batch dim
    tb = min(batch_tile, (B // 8) * 8)            # multiple of 8, <= B
    if pl.cdiv(B, tb) < 2 and B > 16:
        tb = max(8, ((B // 2) // 8) * 8)          # split so both TensorCores get work
    return tb


def actor_critic_forward(x, a, eps, fused_params, *, batch_tile=4096):
    """Fused ActorCritic forward. Returns (pi, logp, logp_pi, v) like the PyTorch module.

    `fused_params` comes from fuse_actor_critic_params() (built once per param update)."""
    w1, w2, w3, slab = fused_params
    B, in_features = x.shape
    hidden2 = int(w1.shape[1])
    act_dim = int(w3.shape[1]) - 1
    out_width = act_dim + 3
    tanh_dtype = w1.dtype        # bf16 tanh on the bf16 path (v6e/v7x); f32 path stays f32

    TB = _pick_batch_tile(B, batch_tile)
    grid = pl.cdiv(B, TB)        # partial last block handled by Pallas (masked writeback)

    out = pl.pallas_call(
        _make_kernel(act_dim, hidden2, tanh_dtype),
        out_shape=jax.ShapeDtypeStruct((B, out_width), jnp.float32),
        grid=(grid,),
        in_specs=[
            pl.BlockSpec((TB, in_features), lambda i: (i, 0)),     # x     (tiled)
            pl.BlockSpec((TB, act_dim), lambda i: (i, 0)),         # a     (tiled)
            pl.BlockSpec((TB, act_dim), lambda i: (i, 0)),         # eps   (tiled)
            pl.BlockSpec(w1.shape, lambda i: (0, 0)),              # weights: VMEM-resident
            pl.BlockSpec(w2.shape, lambda i: (0, 0)),
            pl.BlockSpec(w3.shape, lambda i: (0, 0)),
            pl.BlockSpec(slab.shape, lambda i: (0, 0)),            # constants slab
        ],
        out_specs=pl.BlockSpec((TB, out_width), lambda i: (i, 0)),
        compiler_params=pltpu.CompilerParams(
            dimension_semantics=("parallel",),       # megacore-shardable batch axis
            vmem_limit_bytes=32 * 1024 * 1024,       # footprint is a few MiB; safe everywhere
        ),
    )(x, a, eps, w1, w2, w3, slab)

    pi = out[:, :act_dim]
    logp = out[:, act_dim]
    logp_pi = out[:, act_dim + 1]
    v = out[:, act_dim + 2]
    return pi, logp, logp_pi, v


# ----------------------------------------------------------------------------- reference & init

def actor_critic_reference(x, a, eps, log_std, mu_params, v_params):
    """Pure-JAX reference matching the PyTorch forward (f32 throughout)."""
    def mlp(inp, params):
        (w1, b1), (w2, b2), (w3, b3) = params
        h = jnp.tanh(inp @ w1 + b1)
        h = jnp.tanh(h @ w2 + b2)
        return h @ w3 + b3

    mu = mlp(x, mu_params)
    v = mlp(x, v_params).reshape(-1)
    std = jnp.exp(log_std)
    pi = mu + std * eps
    half_log_2pi = 0.5 * math.log(2.0 * math.pi)

    def logp_of(val):
        z = (val - mu) / std
        return jnp.sum(-0.5 * z * z - log_std - half_log_2pi, axis=1)

    return pi, logp_of(a), logp_of(pi), v


def init_linear(key, fan_in, fan_out):
    """Deterministic nn.Linear-style init: U(-1/sqrt(fan_in), 1/sqrt(fan_in))."""
    kw, kb = jax.random.split(key)
    bound = 1.0 / math.sqrt(fan_in)
    w = jax.random.uniform(kw, (fan_in, fan_out), jnp.float32, -bound, bound)
    b = jax.random.uniform(kb, (1, fan_out), jnp.float32, -bound, bound)
    return w, b


def init_mlp(key, layer_sizes):
    keys = jax.random.split(key, len(layer_sizes) - 1)
    return [init_linear(k, layer_sizes[i], layer_sizes[i + 1])
            for i, k in enumerate(keys)]


# ----------------------------------------------------------------------------- demo

if __name__ == "__main__":
    import numpy as np

    B = 2
    in_features = 16
    hidden_sizes = (32, 32)
    act_dim = 4

    root = jax.random.PRNGKey(0)
    k_x, k_a, k_eps, k_mu, k_v, k_x2, k_a2, k_eps2 = jax.random.split(root, 8)

    x = jax.random.normal(k_x, (B, in_features), jnp.float32)
    a = jax.random.normal(k_a, (B, act_dim), jnp.float32)
    eps = jax.random.normal(k_eps, (B, act_dim), jnp.float32)   # noise for Normal.sample()

    # GaussianPolicy.log_std = -0.5 * ones(act_dim)
    log_std = jnp.full((act_dim,), -0.5, dtype=jnp.float32)

    mu_params = init_mlp(k_mu, [in_features] + list(hidden_sizes) + [act_dim])
    v_params = init_mlp(k_v, [in_features] + list(hidden_sizes) + [1])

    # Fused slabs built once (hoisted out of the per-forward path).
    fused_bf16 = fuse_actor_critic_params(log_std, mu_params, v_params,
                                          matmul_dtype=jnp.bfloat16)
    fused_f32 = fuse_actor_critic_params(log_std, mu_params, v_params,
                                         matmul_dtype=jnp.float32)

    # Fast path: bf16 matmuls + bf16 tanh (v6e/v7x), f32 accumulation / log-prob math.
    pi, logp, logp_pi, v = actor_critic_forward(x, a, eps, fused_bf16)
    jax.block_until_ready((pi, logp, logp_pi, v))

    assert pi.shape == (B, act_dim)
    assert logp.shape == (B,)
    assert logp_pi.shape == (B,)
    assert v.shape == (B,)

    # Correctness: f32 path vs pure-JAX reference.
    pi32, logp32, logp_pi32, v32 = actor_critic_forward(x, a, eps, fused_f32)
    rpi, rlogp, rlogp_pi, rv = actor_critic_reference(
        x, a, eps, log_std.reshape(1, -1), mu_params, v_params)
    jax.block_until_ready((pi32, logp32, logp_pi32, v32))

    np.testing.assert_allclose(np.asarray(pi32), np.asarray(rpi), rtol=1e-5, atol=1e-4)
    np.testing.assert_allclose(np.asarray(logp32), np.asarray(rlogp), rtol=1e-5, atol=1e-4)
    np.testing.assert_allclose(np.asarray(logp_pi32), np.asarray(rlogp_pi), rtol=1e-5, atol=1e-4)
    np.testing.assert_allclose(np.asarray(v32), np.asarray(rv), rtol=1e-5, atol=1e-4)

    # Remainder-tile path (B not a multiple of TB): exercises the partial last block.
    B2 = 20
    x2 = jax.random.normal(k_x2, (B2, in_features), jnp.float32)
    a2 = jax.random.normal(k_a2, (B2, act_dim), jnp.float32)
    eps2 = jax.random.normal(k_eps2, (B2, act_dim), jnp.float32)
    p2, l2, lp2, v2 = actor_critic_forward(x2, a2, eps2, fused_f32, batch_tile=8)
    rp2, rl2, rlp2, rv2 = actor_critic_reference(
        x2, a2, eps2, log_std.reshape(1, -1), mu_params, v_params)
    jax.block_until_ready((p2, l2, lp2, v2))

    np.testing.assert_allclose(np.asarray(p2), np.asarray(rp2), rtol=1e-5, atol=1e-4)
    np.testing.assert_allclose(np.asarray(l2), np.asarray(rl2), rtol=1e-5, atol=1e-4)
    np.testing.assert_allclose(np.asarray(lp2), np.asarray(rlp2), rtol=1e-5, atol=1e-4)
    np.testing.assert_allclose(np.asarray(v2), np.asarray(rv2), rtol=1e-5, atol=1e-4)

    # TODO(synk): only the GaussianPolicy (Box) branch is kernelized; Categorical/Beta/PERT
    # branches and in-kernel RNG sampling (eps is supplied by the caller) are not.
    print("KERNEL_OK")
</pallas_src>

<mosaic_0001>
module attributes {stable_mosaic.version = 11 : i64} {
  func.func @kernel(%arg0: i32, %arg1: memref<2x16xf32, #tpu.memory_space<vmem>>, %arg2: memref<2x4xf32, #tpu.memory_space<vmem>>, %arg3: memref<2x4xf32, #tpu.memory_space<vmem>>, %arg4: memref<16x64xbf16, #tpu.memory_space<vmem>>, %arg5: memref<64x64xbf16, #tpu.memory_space<vmem>>, %arg6: memref<64x5xbf16, #tpu.memory_space<vmem>>, %arg7: memref<6x64xf32, #tpu.memory_space<vmem>>, %arg8: memref<2x7xf32, #tpu.memory_space<vmem>>) attributes {dimension_semantics = [#tpu.dimension_semantics<parallel>], iteration_bounds = array<i64: 1>, scalar_prefetch = 0 : i64, scratch_operands = 0 : i64, tpu.core_type = #tpu.core_type<tc>, window_params = [{transform_indices = @transform_0, window_bounds = array<i64: 2, 16>}, {transform_indices = @transform_1, window_bounds = array<i64: 2, 4>}, {transform_indices = @transform_2, window_bounds = array<i64: 2, 4>}, {pipeline_mode = #tpu.pipeline_mode<synchronous>, transform_indices = @transform_3, window_bounds = array<i64: 16, 64>}, {pipeline_mode = #tpu.pipeline_mode<synchronous>, transform_indices = @transform_4, window_bounds = array<i64: 64, 64>}, {pipeline_mode = #tpu.pipeline_mode<synchronous>, transform_indices = @transform_5, window_bounds = array<i64: 64, 5>}, {pipeline_mode = #tpu.pipeline_mode<synchronous>, transform_indices = @transform_6, window_bounds = array<i64: 6, 64>}, {transform_indices = @transform_7, window_bounds = array<i64: 2, 7>}]} {
    %c0 = arith.constant 0 : index
    %c0_0 = arith.constant 0 : index
    %0 = vector.load %arg1[%c0, %c0_0] : memref<2x16xf32, #tpu.memory_space<vmem>>, vector<2x16xf32>
    %1 = arith.truncf %0 : vector<2x16xf32> to vector<2x16xbf16>
    %c0_1 = arith.constant 0 : index
    %c0_2 = arith.constant 0 : index
    %2 = vector.load %arg7[%c0_1, %c0_2] : memref<6x64xf32, #tpu.memory_space<vmem>>, vector<6x64xf32>
    %3 = vector.extract_strided_slice %2 {offsets = [0, 0], sizes = [1, 64], strides = [1, 1]} : vector<6x64xf32> to vector<1x64xf32>
    %4 = vector.extract_strided_slice %2 {offsets = [1, 0], sizes = [1, 64], strides = [1, 1]} : vector<6x64xf32> to vector<1x64xf32>
    %5 = vector.extract_strided_slice %2 {offsets = [2, 0], sizes = [1, 5], strides = [1, 1]} : vector<6x64xf32> to vector<1x5xf32>
    %6 = vector.extract_strided_slice %2 {offsets = [3, 0], sizes = [1, 4], strides = [1, 1]} : vector<6x64xf32> to vector<1x4xf32>
    %7 = vector.extract_strided_slice %2 {offsets = [4, 0], sizes = [1, 4], strides = [1, 1]} : vector<6x64xf32> to vector<1x4xf32>
    %8 = vector.extract_strided_slice %2 {offsets = [5, 0], sizes = [1, 1], strides = [1, 1]} : vector<6x64xf32> to vector<1x1xf32>
    %c0_3 = arith.constant 0 : index
    %c0_4 = arith.constant 0 : index
    %9 = vector.load %arg4[%c0_3, %c0_4] : memref<16x64xbf16, #tpu.memory_space<vmem>>, vector<16x64xbf16>
    %cst = arith.constant dense<0.000000e+00> : vector<2x64xf32>
    %10 = tpu.matmul %1, %9, %cst {dimension_numbers = #tpu.dot_dimension_numbers<[1], [0], [0], [1], [0, 0, 1, 1], [], []>} : vector<2x16xbf16>, vector<16x64xbf16>, vector<2x64xf32> -> vector<2x64xf32>
    %11 = vector.broadcast %3 : vector<1x64xf32> to vector<2x64xf32>
    %12 = arith.addf %10, %11 : vector<2x64xf32>
    %13 = arith.truncf %12 : vector<2x64xf32> to vector<2x64xbf16>
    %14 = math.tanh %13 : vector<2x64xbf16>
    %c0_5 = arith.constant 0 : index
    %c0_6 = arith.constant 0 : index
    %15 = vector.load %arg5[%c0_5, %c0_6] : memref<64x64xbf16, #tpu.memory_space<vmem>>, vector<64x64xbf16>
    %cst_7 = arith.constant dense<0.000000e+00> : vector<2x64xf32>
    %16 = tpu.matmul %14, %15, %cst_7 {dimension_numbers = #tpu.dot_dimension_numbers<[1], [0], [0], [1], [0, 0, 1, 1], [], []>} : vector<2x64xbf16>, vector<64x64xbf16>, vector<2x64xf32> -> vector<2x64xf32>
    %17 = vector.broadcast %4 : vector<1x64xf32> to vector<2x64xf32>
    %18 = arith.addf %16, %17 : vector<2x64xf32>
    %19 = arith.truncf %18 : vector<2x64xf32> to vector<2x64xbf16>
    %20 = math.tanh %19 : vector<2x64xbf16>
    %c0_8 = arith.constant 0 : index
    %c0_9 = arith.constant 0 : index
    %21 = vector.load %arg6[%c0_8, %c0_9] : memref<64x5xbf16, #tpu.memory_space<vmem>>, vector<64x5xbf16>
    %cst_10 = arith.constant dense<0.000000e+00> : vector<2x5xf32>
    %22 = tpu.matmul %20, %21, %cst_10 {dimension_numbers = #tpu.dot_dimension_numbers<[1], [0], [0], [1], [0, 0, 1, 1], [], []>} : vector<2x64xbf16>, vector<64x5xbf16>, vector<2x5xf32> -> vector<2x5xf32>
    %23 = vector.broadcast %5 : vector<1x5xf32> to vector<2x5xf32>
    %24 = arith.addf %22, %23 : vector<2x5xf32>
    %25 = vector.extract_strided_slice %24 {offsets = [0, 0], sizes = [2, 4], strides = [1, 1]} : vector<2x5xf32> to vector<2x4xf32>
    %26 = vector.extract_strided_slice %24 {offsets = [0, 4], sizes = [2, 1], strides = [1, 1]} : vector<2x5xf32> to vector<2x1xf32>
    %c0_11 = arith.constant 0 : index
    %c0_12 = arith.constant 0 : index
    %27 = vector.load %arg2[%c0_11, %c0_12] : memref<2x4xf32, #tpu.memory_space<vmem>>, vector<2x4xf32>
    %c0_13 = arith.constant 0 : index
    %c0_14 = arith.constant 0 : index
    %28 = vector.load %arg3[%c0_13, %c0_14] : memref<2x4xf32, #tpu.memory_space<vmem>>, vector<2x4xf32>
    %29 = vector.broadcast %6 : vector<1x4xf32> to vector<2x4xf32>
    %30 = arith.mulf %29, %28 : vector<2x4xf32>
    %31 = arith.addf %25, %30 : vector<2x4xf32>
    %32 = arith.subf %27, %25 : vector<2x4xf32>
    %33 = vector.broadcast %7 : vector<1x4xf32> to vector<2x4xf32>
    %34 = arith.mulf %32, %33 : vector<2x4xf32>
    %35 = arith.mulf %34, %34 : vector<2x4xf32>
    %cst_15 = arith.constant dense<0.000000e+00> : vector<2xf32>
    %36 = vector.multi_reduction <add>, %35, %cst_15 [1] : vector<2x4xf32> to vector<2xf32>
    %37 = vector.shape_cast %36 : vector<2xf32> to vector<2x1xf32>
    %cst_16 = arith.constant -5.000000e-01 : f32
    %38 = vector.broadcast %cst_16 : f32 to vector<2x1xf32>
    %39 = arith.mulf %38, %37 : vector<2x1xf32>
    %40 = vector.broadcast %8 : vector<1x1xf32> to vector<2x1xf32>
    %41 = arith.addf %39, %40 : vector<2x1xf32>
    %42 = arith.mulf %28, %28 : vector<2x4xf32>
    %cst_17 = arith.constant dense<0.000000e+00> : vector<2xf32>
    %43 = vector.multi_reduction <add>, %42, %cst_17 [1] : vector<2x4xf32> to vector<2xf32>
    %44 = vector.shape_cast %43 : vector<2xf32> to vector<2x1xf32>
    %cst_18 = arith.constant -5.000000e-01 : f32
    %45 = vector.broadcast %cst_18 : f32 to vector<2x1xf32>
    %46 = arith.mulf %45, %44 : vector<2x1xf32>
    %47 = vector.broadcast %8 : vector<1x1xf32> to vector<2x1xf32>
    %48 = arith.addf %46, %47 : vector<2x1xf32>
    %c0_19 = arith.constant 0 : index
    %c0_20 = arith.constant 0 : index
    %49 = vector.load %arg8[%c0_19, %c0_20] : memref<2x7xf32, #tpu.memory_space<vmem>>, vector<2x4xf32>
    tpu.vector_store %arg8[%c0_19, %c0_20], %31 {strides = array<i32>} : memref<2x7xf32, #tpu.memory_space<vmem>>, vector<2x4xf32>,
    %c0_21 = arith.constant 0 : index
    %c4 = arith.constant 4 : index
    %50 = vector.load %arg8[%c0_21, %c4] : memref<2x7xf32, #tpu.memory_space<vmem>>, vector<2x1xf32>
    tpu.vector_store %arg8[%c0_21, %c4], %41 {strides = array<i32>} : memref<2x7xf32, #tpu.memory_space<vmem>>, vector<2x1xf32>,
    %c0_22 = arith.constant 0 : index
    %c5 = arith.constant 5 : index
    %51 = vector.load %arg8[%c0_22, %c5] : memref<2x7xf32, #tpu.memory_space<vmem>>, vector<2x1xf32>
    tpu.vector_store %arg8[%c0_22, %c5], %48 {strides = array<i32>} : memref<2x7xf32, #tpu.memory_space<vmem>>, vector<2x1xf32>,
    %c0_23 = arith.constant 0 : index
    %c6 = arith.constant 6 : index
    %52 = vector.load %arg8[%c0_23, %c6] : memref<2x7xf32, #tpu.memory_space<vmem>>, vector<2x1xf32>
    tpu.vector_store %arg8[%c0_23, %c6], %26 {strides = array<i32>} : memref<2x7xf32, #tpu.memory_space<vmem>>, vector<2x1xf32>,
    return
  }
  func.func @transform_0(%arg0: i32) -> (i32, i32) {
    %c0_i32 = arith.constant 0 : i32
    %c0_i32_0 = arith.constant 0 : i32
    return %arg0, %c0_i32 : i32, i32
  }
  func.func @transform_1(%arg0: i32) -> (i32, i32) {
    %c0_i32 = arith.constant 0 : i32
    %c0_i32_0 = arith.constant 0 : i32
    return %arg0, %c0_i32 : i32, i32
  }
  func.func @transform_2(%arg0: i32) -> (i32, i32) {
    %c0_i32 = arith.constant 0 : i32
    %c0_i32_0 = arith.constant 0 : i32
    return %arg0, %c0_i32 : i32, i32
  }
  func.func @transform_3(%arg0: i32) -> (i32, i32) {
    %c0_i32 = arith.constant 0 : i32
    %c0_i32_0 = arith.constant 0 : i32
    %c0_i32_1 = arith.constant 0 : i32
    return %c0_i32, %c0_i32_0 : i32, i32
  }
  func.func @transform_4(%arg0: i32) -> (i32, i32) {
    %c0_i32 = arith.constant 0 : i32
    %c0_i32_0 = arith.constant 0 : i32
    %c0_i32_1 = arith.constant 0 : i32
    return %c0_i32, %c0_i32_0 : i32, i32
  }
  func.func @transform_5(%arg0: i32) -> (i32, i32) {
    %c0_i32 = arith.constant 0 : i32
    %c0_i32_0 = arith.constant 0 : i32
    %c0_i32_1 = arith.constant 0 : i32
    return %c0_i32, %c0_i32_0 : i32, i32
  }
  func.func @transform_6(%arg0: i32) -> (i32, i32) {
    %c0_i32 = arith.constant 0 : i32
    %c0_i32_0 = arith.constant 0 : i32
    %c0_i32_1 = arith.constant 0 : i32
    return %c0_i32, %c0_i32_0 : i32, i32
  }
  func.func @transform_7(%arg0: i32) -> (i32, i32) {
    %c0_i32 = arith.constant 0 : i32
    %c0_i32_0 = arith.constant 0 : i32
    return %arg0, %c0_i32 : i32, i32
  }
}

</mosaic_0001>

<llo_original>
// kernel: tpu_custom_call.1
$region0: #{tpu_custom_call.1}
  #allocation0 [shape = 'u32[]', space=smem, size = 0x4, offset = 0x4, fixed_abs, tag = 'smem constant byte address 0x4 - core index']
  #allocation1 [shape = 'u32[144,128]{1,0:T(1,128)}', space=vmem, size = 0x12000, scoped, tag = 'internal scratch']
  %s0 = inlined_call_operand.vmem [shape: f32[2,16], index: 0, kind: input, shape index: {}]
  %s1 = inlined_call_operand.hbm [shape: f32[2,4], index: 1, kind: input, shape index: {}]
  %s2 = inlined_call_operand.hbm [shape: f32[2,4], index: 2, kind: input, shape index: {}]
  %s3 = inlined_call_operand.vmem [shape: bf16[16,64], index: 3, kind: input, shape index: {}]
  %s4 = inlined_call_operand.vmem [shape: bf16[64,64], index: 4, kind: input, shape index: {}]
  %s5 = inlined_call_operand.vmem [shape: bf16[64,5], index: 5, kind: input, shape index: {}]
  %s6 = inlined_call_operand.vmem [shape: f32[6,64], index: 6, kind: input, shape index: {}]
  %s7 = inlined_call_operand.hbm [shape: f32[2,7], index: 7, kind: output, shape index: {}]
  %s8 = sld [smem:[#allocation0]]
  $region46: #{tpu_custom_call.1} parent=0
    _
  %s10 = ssub.s32 1, %s8
  %s11 = scalar_select 0, %s10, %s8
  $region1: #{tpu_custom_call.1} parent=0
    #allocation2 [shape = 'u8[1024]{0}', space=vmem, size = 0x400, scoped, tag = 'input window, operand 1, single buffered']
    #allocation3 [shape = 's32[1]{0}', space=sflag, size = 0x4, scoped, tag = 'scoped memory for tpu_custom_call.1']
    #allocation4 [shape = 's32[1]{0}', space=sflag, size = 0x4, scoped, tag = 'scoped memory for tpu_custom_call.1']
    #allocation5 [shape = 'u8[1024]{0}', space=vmem, size = 0x400, scoped, tag = 'input window, operand 2, single buffered']
    #allocation6 [shape = 's32[1]{0}', space=sflag, size = 0x4, scoped, tag = 'scoped memory for tpu_custom_call.1']
    #allocation7 [shape = 'u8[1024]{0}', space=vmem, size = 0x400, scoped, tag = 'output window, operand 0, single buffered']
    %12 = vsyncpa [#allocation3], 0
    %13 = vsyncpa [#allocation6], 0
    %14 = vsyncpa [#allocation4], 0
    // Predicated region
    $region2: #{tpu_custom_call.1} parent=1 // pred_check
      _
    $region3: #{tpu_custom_call.1} parent=1 // pred_check_branch
      %16 = sbr.rel (0) target = $region5
    $region4: #{tpu_custom_call.1} parent=1 // pred_region
      _
    $region5: #{tpu_custom_call.1} parent=1 // pred_fallthru
      _
    // Predicated region
    $region6: #{tpu_custom_call.1} parent=1 // pred_check
      _
    $region7: #{tpu_custom_call.1} parent=1 // pred_check_branch
      %18 = sbr.rel (0) target = $region9
    $region8: #{tpu_custom_call.1} parent=1 // pred_region
      %s20 = ssub.s32 32, 32
      %21 = vsyncadd [#allocation3], %s20
      %s23 = sshll.u32 [#allocation2], 4
      %s24 = int_to_ptr.vmem [resolvable:$true] %s23
      %26 = dma.hbm_to_vmem [thread:$0]  %s1, 32, %s24, [#allocation3]
    $region9: #{tpu_custom_call.1} parent=1 // pred_fallthru
      _
    // Predicated region
    $region10: #{tpu_custom_call.1} parent=1 // pred_check
      _
    $region11: #{tpu_custom_call.1} parent=1 // pred_check_branch
      %28 = sbr.rel (0) target = $region13
    $region12: #{tpu_custom_call.1} parent=1 // pred_region
      %s30 = ssub.s32 32, 32
      %31 = vsyncadd [#allocation6], %s30
      %s33 = sshll.u32 [#allocation5], 4
      %s34 = int_to_ptr.vmem [resolvable:$true] %s33
      %36 = dma.hbm_to_vmem [thread:$0]  %s2, 32, %s34, [#allocation6]
    $region13: #{tpu_custom_call.1} parent=1 // pred_fallthru
      _
    // Predicated region
    $region14: #{tpu_custom_call.1} parent=1 // pred_check
      _
    $region15: #{tpu_custom_call.1} parent=1 // pred_check_branch
      %38 = sbr.rel (0) target = $region17
    $region16: #{tpu_custom_call.1} parent=1 // pred_region
      _
    $region17: #{tpu_custom_call.1} parent=1 // pred_fallthru
      _
    // Predicated region
    $region18: #{tpu_custom_call.1} parent=1 // pred_check
      _
    $region19: #{tpu_custom_call.1} parent=1 // pred_check_branch
      %40 = sbr.rel (0) target = $region21
    $region20: #{tpu_custom_call.1} parent=1 // pred_region
      _
    $region21: #{tpu_custom_call.1} parent=1 // pred_fallthru
      _
    // Predicated region
    $region22: #{tpu_custom_call.1} parent=1 // pred_check
      _
    $region23: #{tpu_custom_call.1} parent=1 // pred_check_branch
      %42 = sbr.rel (0) target = $region25
    $region24: #{tpu_custom_call.1} parent=1 // pred_region
      _
    $region25: #{tpu_custom_call.1} parent=1 // pred_fallthru
      _
    // Predicated region
    $region26: #{tpu_custom_call.1} parent=1 // pred_check
      _
    $region27: #{tpu_custom_call.1} parent=1 // pred_check_branch
      %44 = sbr.rel (0) target = $region29
    $region28: #{tpu_custom_call.1} parent=1 // pred_region
      _
    $region29: #{tpu_custom_call.1} parent=1 // pred_fallthru
      _
    // Predicated region
    $region30: #{tpu_custom_call.1} parent=1 // pred_check
      _
    $region31: #{tpu_custom_call.1} parent=1 // pred_check_branch
      %46 = sbr.rel (0) target = $region33
    $region32: #{tpu_custom_call.1} parent=1 // pred_region
      %47 = dma.done [#allocation3], 32
    $region33: #{tpu_custom_call.1} parent=1 // pred_fallthru
      _
    // Predicated region
    $region34: #{tpu_custom_call.1} parent=1 // pred_check
      _
    $region35: #{tpu_custom_call.1} parent=1 // pred_check_branch
      %49 = sbr.rel (0) target = $region37
    $region36: #{tpu_custom_call.1} parent=1 // pred_region
      %50 = dma.done [#allocation6], 32
    $region37: #{tpu_custom_call.1} parent=1 // pred_fallthru
      _
    %v52 = vld [vmem:[%s0] sm:$0x3]
    %v53 = vpack.c.bf16 %v52, %v52
    %v54 = vld [vmem:[%s6] sm:$0x3f]
    %v55 = vld [vmem:[%s3] sm:$0xf]
    %v56 = vld [vmem:[%s3 + $0x4] sm:$0xf]
    %v57 = vlaneseq
    %v58 = vshrl.u32 %v57, 7
    %v59 = vsub.s32 0, %v58
    %v60 = vrot.slane %v54, %v59
    %v63 = vunpack.c.l.b16 %v55
    %v64 = vunpack.c.l.b16 %v56
    %v65 = vpack.c.b16 %v64, %v63
    %vm67 = vcmask 130048
    %v69 = vsel %vm67, %v53, 0
    %71 = vmatprep.subr.bf16.mxu0 0
    %72 = vmatpush1.bf16.msra.mxu0 %v65
    %73 = vmatprep.subr.bf16.mxu0 0
    %74 = vmatpush1.bf16.msra.mxu0 0
    %75 = vmatprep.subr.bf16.mxu0 0
    %76 = vmatpush1.bf16.msra.mxu0 0
    %77 = vmatprep.subr.bf16.mxu0 0
    %78 = vmatpush1.bf16.msra.mxu0 0
    %79 = vmatprep.subr.bf16.mxu0 0
    %80 = vmatpush1.bf16.msra.mxu0 0
    %81 = vmatprep.subr.bf16.mxu0 0
    %82 = vmatpush1.bf16.msra.mxu0 0
    %83 = vmatprep.subr.bf16.mxu0 0
    %84 = vmatpush1.bf16.msra.mxu0 0
    %85 = vmatprep.subr.bf16.mxu0 0
    %86 = vmatpush1.bf16.msra.mxu0 0
    %87 = vmatprep.subr.bf16.mxu0 0
    %88 = vmatpush1.bf16.msra.mxu0 0
    %89 = vmatprep.subr.bf16.mxu0 0
    %90 = vmatpush1.bf16.msra.mxu0 0
    %91 = vmatprep.subr.bf16.mxu0 0
    %92 = vmatpush1.bf16.msra.mxu0 0
    %93 = vmatprep.subr.bf16.mxu0 0
    %94 = vmatpush1.bf16.msra.mxu0 0
    %95 = vmatprep.subr.bf16.mxu0 0
    %96 = vmatpush1.bf16.msra.mxu0 0
    %97 = vmatprep.subr.bf16.mxu0 0
    %98 = vmatpush1.bf16.msra.mxu0 0
    %99 = vmatprep.subr.bf16.mxu0 0
    %100 = vmatpush1.bf16.msra.mxu0 0
    %101 = vmatprep.subr.bf16.mxu0 0
    %102 = vmatpush1.bf16.msra.mxu0 0
    %103 = vmatprep.mubr.bf16.mxu0 0
    %104 = vmatmul.mubr.bf16.gmra.mrb[0].mxu0 %v69
    %v105 = vpop.f32.mrb[0].mxu0
    %v106 = vadd.f32 %v60, %v105
    %v107 = vpop.f32.mrb[0].mxu0
    %v108 = vpop.f32.mrb[0].mxu0
    %v109 = vpop.f32.mrb[0].mxu0
    %110 = vdwg.mxu0
    %v111 = vpack.c.bf16 %v106, %v106
    %v112 = vtanh.bf16.pop %v111
    %v113 = vld [vmem:[%s4] sm:$0xf]
    %v114 = vld [vmem:[%s4 + $0x4] sm:$0xf]
    %v115 = vld [vmem:[%s4 + $0x8] sm:$0xf]
    %v116 = vld [vmem:[%s4 + $0xc] sm:$0xf]
    %v117 = vld [vmem:[%s4 + $0x10] sm:$0xf]
    %v118 = vld [vmem:[%s4 + $0x14] sm:$0xf]
    %v119 = vld [vmem:[%s4 + $0x18] sm:$0xf]
    %v120 = vld [vmem:[%s4 + $0x1c] sm:$0xf]
    %v121 = vlaneseq
    %v122 = vshrl.u32 %v121, 7
    %v123 = vsub.s32 1, %v122
    %v124 = vrot.slane %v54, %v123
    %v133 = vunpack.c.l.b16 %v113
    %v134 = vunpack.c.l.b16 %v114
    %v135 = vunpack.c.l.b16 %v115
    %v136 = vunpack.c.l.b16 %v116
    %v137 = vunpack.c.l.b16 %v117
    %v138 = vunpack.c.l.b16 %v118
    %v139 = vunpack.c.l.b16 %v119
    %v140 = vunpack.c.l.b16 %v120
    %v141 = vpack.c.b16 %v134, %v133
    %v142 = vpack.c.b16 %v136, %v135
    %v143 = vpack.c.b16 %v138, %v137
    %v144 = vpack.c.b16 %v140, %v139
    %vm149 = vcmask 523264
    %v151 = vsel %vm149, %v112, 0
    %153 = vmatprep.subr.bf16.mxu0 0
    %154 = vmatpush1.bf16.msra.mxu0 %v141
    %155 = vmatprep.subr.bf16.mxu0 0
    %156 = vmatpush1.bf16.msra.mxu0 %v142
    %157 = vmatprep.subr.bf16.mxu0 0
    %158 = vmatpush1.bf16.msra.mxu0 %v143
    %159 = vmatprep.subr.bf16.mxu0 0
    %160 = vmatpush1.bf16.msra.mxu0 %v144
    %161 = vmatprep.subr.bf16.mxu0 0
    %162 = vmatpush1.bf16.msra.mxu0 0
    %163 = vmatprep.subr.bf16.mxu0 0
    %164 = vmatpush1.bf16.msra.mxu0 0
    %165 = vmatprep.subr.bf16.mxu0 0
    %166 = vmatpush1.bf16.msra.mxu0 0
    %167 = vmatprep.subr.bf16.mxu0 0
    %168 = vmatpush1.bf16.msra.mxu0 0
    %169 = vmatprep.subr.bf16.mxu0 0
    %170 = vmatpush1.bf16.msra.mxu0 0
    %171 = vmatprep.subr.bf16.mxu0 0
    %172 = vmatpush1.bf16.msra.mxu0 0
    %173 = vmatprep.subr.bf16.mxu0 0
    %174 = vmatpush1.bf16.msra.mxu0 0
    %175 = vmatprep.subr.bf16.mxu0 0
    %176 = vmatpush1.bf16.msra.mxu0 0
    %177 = vmatprep.subr.bf16.mxu0 0
    %178 = vmatpush1.bf16.msra.mxu0 0
    %179 = vmatprep.subr.bf16.mxu0 0
    %180 = vmatpush1.bf16.msra.mxu0 0
    %181 = vmatprep.subr.bf16.mxu0 0
    %182 = vmatpush1.bf16.msra.mxu0 0
    %183 = vmatprep.subr.bf16.mxu0 0
    %184 = vmatpush1.bf16.msra.mxu0 0
    %185 = vmatprep.mubr.bf16.mxu0 0
    %186 = vmatmul.mubr.bf16.gmra.mrb[0].mxu0 %v151
    %v187 = vpop.f32.mrb[0].mxu0
    %v188 = vadd.f32 %v124, %v187
    %v189 = vpop.f32.mrb[0].mxu0
    %v190 = vpop.f32.mrb[0].mxu0
    %v191 = vpop.f32.mrb[0].mxu0
    %192 = vdwg.mxu0
    %v193 = vpack.c.bf16 %v188, %v188
    %v194 = vtanh.bf16.pop %v193
    %v195 = vld [vmem:[%s5] sm:$0xf]
    %v196 = vld [vmem:[%s5 + $0x4] sm:$0xf]
    %v197 = vld [vmem:[%s5 + $0x8] sm:$0xf]
    %v198 = vld [vmem:[%s5 + $0xc] sm:$0xf]
    %v199 = vld [vmem:[%s5 + $0x10] sm:$0xf]
    %v200 = vld [vmem:[%s5 + $0x14] sm:$0xf]
    %v201 = vld [vmem:[%s5 + $0x18] sm:$0xf]
    %v202 = vld [vmem:[%s5 + $0x1c] sm:$0xf]
    %v203 = vlaneseq
    %v204 = vshrl.u32 %v203, 7
    %v205 = vsub.s32 2, %v204
    %v206 = vrot.slane %v54, %v205
    %v215 = vunpack.c.l.b16 %v195
    %v216 = vunpack.c.l.b16 %v196
    %v217 = vunpack.c.l.b16 %v197
    %v218 = vunpack.c.l.b16 %v198
    %v219 = vunpack.c.l.b16 %v199
    %v220 = vunpack.c.l.b16 %v200
    %v221 = vunpack.c.l.b16 %v201
    %v222 = vunpack.c.l.b16 %v202
    %v223 = vpack.c.b16 %v216, %v215
    %v224 = vpack.c.b16 %v218, %v217
    %v225 = vpack.c.b16 %v220, %v219
    %v226 = vpack.c.b16 %v222, %v221
    %v232 = vsel %vm149, %v194, 0
    %234 = vmatprep.subr.bf16.mxu0 0
    %235 = vmatpush1.bf16.msra.mxu0 %v223
    %236 = vmatprep.subr.bf16.mxu0 0
    %237 = vmatpush1.bf16.msra.mxu0 %v224
    %238 = vmatprep.subr.bf16.mxu0 0
    %239 = vmatpush1.bf16.msra.mxu0 %v225
    %240 = vmatprep.subr.bf16.mxu0 0
    %241 = vmatpush1.bf16.msra.mxu0 %v226
    %242 = vmatprep.subr.bf16.mxu0 0
    %243 = vmatpush1.bf16.msra.mxu0 0
    %244 = vmatprep.subr.bf16.mxu0 0
    %245 = vmatpush1.bf16.msra.mxu0 0
    %246 = vmatprep.subr.bf16.mxu0 0
    %247 = vmatpush1.bf16.msra.mxu0 0
    %248 = vmatprep.subr.bf16.mxu0 0
    %249 = vmatpush1.bf16.msra.mxu0 0
    %250 = vmatprep.subr.bf16.mxu0 0
    %251 = vmatpush1.bf16.msra.mxu0 0
    %252 = vmatprep.subr.bf16.mxu0 0
    %253 = vmatpush1.bf16.msra.mxu0 0
    %254 = vmatprep.subr.bf16.mxu0 0
    %255 = vmatpush1.bf16.msra.mxu0 0
    %256 = vmatprep.subr.bf16.mxu0 0
    %257 = vmatpush1.bf16.msra.mxu0 0
    %258 = vmatprep.subr.bf16.mxu0 0
    %259 = vmatpush1.bf16.msra.mxu0 0
    %260 = vmatprep.subr.bf16.mxu0 0
    %261 = vmatpush1.bf16.msra.mxu0 0
    %262 = vmatprep.subr.bf16.mxu0 0
    %263 = vmatpush1.bf16.msra.mxu0 0
    %264 = vmatprep.subr.bf16.mxu0 0
    %265 = vmatpush1.bf16.msra.mxu0 0
    %266 = vmatprep.mubr.bf16.mxu0 0
    %267 = vmatmul.mubr.bf16.gmra.mrb[0].mxu0 %v232
    %v268 = vpop.f32.mrb[0].mxu0
    %v269 = vadd.f32 %v206, %v268
    %v270 = vpop.f32.mrb[0].mxu0
    %v271 = vpop.f32.mrb[0].mxu0
    %v272 = vpop.f32.mrb[0].mxu0
    %273 = vdwg.mxu0
    %v274 = vld [vmem:[#allocation2] sm:$0x3]
    %v275 = vld [vmem:[#allocation5] sm:$0x3]
    %v276 = vlaneseq
    %v277 = vshrl.u32 %v276, 7
    %v278 = vsub.s32 3, %v277
    %v279 = vrot.slane %v54, %v278
    %v280 = vmul.f32 %v279, %v275
    %v281 = vadd.f32 %v269, %v280
    %v282 = vsub.f32 %v274, %v269
    %v283 = vlaneseq
    %v284 = vshrl.u32 %v283, 7
    %v285 = vsub.s32 4, %v284
    %v286 = vrot.slane %v54, %v285
    %v287 = vmul.f32 %v282, %v286
    %v288 = vmul.f32 %v287, %v287
    %vm289 = vcmask 25600
    %v290 = vsel %vm289, %v288, 0.0
    %291 = vadd.xlane.f32.xlu0 %v290
    %v292 = vpop.xlane.xlu0 %291
    %v293 = vmul.f32 %v292, -0.5
    %v294 = vlaneseq
    %v295 = vshrl.u32 %v294, 7
    %v296 = vsub.s32 5, %v295
    %v297 = vrot.slane %v54, %v296
    %v298 = vadd.f32 %v293, %v297
    %v299 = vmul.f32 %v275, %v275
    %v300 = vsel %vm289, %v299, 0.0
    %301 = vadd.xlane.f32.xlu0 %v300
    %v302 = vpop.xlane.xlu0 %301
    %v303 = vmul.f32 %v302, -0.5
    %v304 = vadd.f32 %v303, %v297
    %305 = vst.msk [vmem:[#allocation7] sm:$0x3] %vm289, %v281
    %307 = vrot.lane.b32.xlu0 %v298, 4
    %v308 = vpop.permute.xlu0 %307
    %vm310 = vcmask 33824
    %311 = vst.msk [vmem:[#allocation7] sm:$0x3] %vm310, %v308
    %313 = vrot.lane.b32.xlu0 %v304, 5
    %v314 = vpop.permute.xlu0 %313
    %vm316 = vcmask 42024
    %317 = vst.msk [vmem:[#allocation7] sm:$0x3] %vm316, %v314
    %319 = vrot.lane.b32.xlu0 %v269, 2
    %v320 = vpop.permute.xlu0 %319
    %vm322 = vcmask 50224
    %323 = vst.msk [vmem:[#allocation7] sm:$0x3] %vm322, %v320
    // Predicated region
    $region38: #{tpu_custom_call.1} parent=1 // pred_check
      _
    $region39: #{tpu_custom_call.1} parent=1 // pred_check_branch
      %325 = sbr.rel (0) target = $region41
    $region40: #{tpu_custom_call.1} parent=1 // pred_region
      %s327 = ssub.s32 32, 32
      %328 = vsyncadd [#allocation4], %s327
      %s330 = sshll.u32 [#allocation7], 4
      %s331 = int_to_ptr.vmem [resolvable:$true] %s330
      %333 = dma.vmem_to_hbm [thread:$0]  %s331, 32, %s7, [#allocation4]
    $region41: #{tpu_custom_call.1} parent=1 // pred_fallthru
      _
    // Predicated region
    $region42: #{tpu_custom_call.1} parent=1 // pred_check
      _
    $region43: #{tpu_custom_call.1} parent=1 // pred_check_branch
      %335 = sbr.rel (0) target = $region45
    $region44: #{tpu_custom_call.1} parent=1 // pred_region
      %336 = dma.done [#allocation4], 32
    $region45: #{tpu_custom_call.1} parent=1 // pred_fallthru
      _
    %337 = vsyncpa [#allocation3], 1
    %338 = vsyncpa [#allocation6], 1
    %339 = vsyncpa [#allocation4], 1

</llo_original>
